<compile_context>
chip_gen: v5e
topology: v5e:2x2
jax: 0.10.0
libtpu: 0.0.40
codegen_flags: <defaults>
</compile_context>

<pallas_src>
import functools
import math

import jax
import jax.numpy as jnp
import numpy as np
from jax.experimental import pallas as pl
from jax.experimental.pallas import tpu as pltpu

_FOLD_LANE = 128                       # lane width to fold small W up to
_MAX_FOLDED_WIDTH = 2048               # only fold if k*W stays modest
_K_TILE = 2048                         # reduction tile when W is very large
_K_TILE_THRESHOLD = 4096               # K-tile only above this W
_TARGET_BLOCK_BYTES = 4 * 1024 * 1024  # ~4 MiB per input block
_VMEM_LIMIT_BYTES = 32 * 1024 * 1024   # raise v5e's 16 MiB default scope


def _round_up(x: int, m: int) -> int:
    return ((x + m - 1) // m) * m


def _cdiv(a: int, b: int) -> int:
    return -(-a // b)


def _plan_row_tiling(n_rows: int, lane_width: int, itemsize: int):
    """Pick (tile_rows, padded_rows): ~_TARGET_BLOCK_BYTES per input block,
    tile_rows a multiple of 8, balanced blocks, padded_rows = n_blocks*tile_rows."""
    bytes_per_row = max(1, lane_width * itemsize)
    tr_cap = max(8, (_TARGET_BLOCK_BYTES // bytes_per_row) // 8 * 8)
    n_blocks = max(1, _cdiv(n_rows, tr_cap))
    tr = _round_up(_cdiv(n_rows, n_blocks), 8)
    return tr, n_blocks * tr


# ---------------------------------------------------------------------------
# elementwise helpers (f32 in-kernel math)
# ---------------------------------------------------------------------------
def _abs_pow(diff, order):
    """|diff| ** order, keeping integer orders on the VPU (no EUP pow)."""
    if order == 2.0:
        return diff * diff
    if order == 1.0:
        return jnp.abs(diff)
    a = jnp.abs(diff)
    io = int(order)
    if float(io) == order and 2 <= io <= 8:
        r = a
        for _ in range(io - 1):
            r = r * a
        return r
    return a ** order


def _root(s, order):
    if order == 1.0:
        return s
    if order == 2.0:
        return jnp.sqrt(s)
    return s ** (1.0 / order)


# ---------------------------------------------------------------------------
# kernels
# ---------------------------------------------------------------------------
def _fold_kernel(pred_ref, gt_ref, seg_ref, out_ref, *, order):
    # pred/gt: (tr, k*W) lane-dense; seg: (k*W, k) static segment-sum matrix.
    diff = gt_ref[...].astype(jnp.float32) - pred_ref[...].astype(jnp.float32)
    powered = _abs_pow(diff, order)
    seg_sum = jnp.dot(powered, seg_ref[...],
                      preferred_element_type=jnp.float32,
                      precision=jax.lax.Precision.HIGHEST)   # (tr, k)
    out_ref[...] = _root(seg_sum, order).astype(out_ref.dtype)


def _fold_weighted_kernel(pred_ref, gt_ref, seg_ref, w_ref, out_ref, *, order):
    diff = gt_ref[...].astype(jnp.float32) - pred_ref[...].astype(jnp.float32)
    powered = _abs_pow(diff, order)
    seg_sum = jnp.dot(powered, seg_ref[...],
                      preferred_element_type=jnp.float32,
                      precision=jax.lax.Precision.HIGHEST)
    d = _root(seg_sum, order) * w_ref[...].astype(jnp.float32)
    out_ref[...] = d.astype(out_ref.dtype)


def _wide_kernel(pred_ref, gt_ref, out_ref, *, order):
    diff = gt_ref[...].astype(jnp.float32) - pred_ref[...].astype(jnp.float32)
    s = jnp.sum(_abs_pow(diff, order), axis=-1, keepdims=True)
    out_ref[...] = _root(s, order).astype(out_ref.dtype)


def _wide_weighted_kernel(pred_ref, gt_ref, w_ref, out_ref, *, order):
    diff = gt_ref[...].astype(jnp.float32) - pred_ref[...].astype(jnp.float32)
    s = jnp.sum(_abs_pow(diff, order), axis=-1, keepdims=True)
    out_ref[...] = (_root(s, order) * w_ref[...].astype(jnp.float32)).astype(out_ref.dtype)


def _ktiled_kernel(pred_ref, gt_ref, out_ref, acc_ref, *, order):
    kk = pl.program_id(1)

    @pl.when(kk == 0)
    def _():
        acc_ref[...] = jnp.zeros_like(acc_ref)

    diff = gt_ref[...].astype(jnp.float32) - pred_ref[...].astype(jnp.float32)
    acc_ref[...] += jnp.sum(_abs_pow(diff, order), axis=-1, keepdims=True)

    @pl.when(kk == pl.num_programs(1) - 1)
    def _():
        out_ref[...] = _root(acc_ref[...], order).astype(out_ref.dtype)


def _ktiled_weighted_kernel(pred_ref, gt_ref, w_ref, out_ref, acc_ref, *, order):
    kk = pl.program_id(1)

    @pl.when(kk == 0)
    def _():
        acc_ref[...] = jnp.zeros_like(acc_ref)

    diff = gt_ref[...].astype(jnp.float32) - pred_ref[...].astype(jnp.float32)
    acc_ref[...] += jnp.sum(_abs_pow(diff, order), axis=-1, keepdims=True)

    @pl.when(kk == pl.num_programs(1) - 1)
    def _():
        d = _root(acc_ref[...], order) * w_ref[...].astype(jnp.float32)
        out_ref[...] = d.astype(out_ref.dtype)


# ---------------------------------------------------------------------------
# wrapper
# ---------------------------------------------------------------------------
def distance(pred, gt, weights=None, order=2.0):
    """Pallas equivalent of Distance(mode='default', order=order, dim=-1).forward
    (without the boolean-mask path)."""
    assert pred.shape == gt.shape
    assert pred.ndim >= 1
    order = float(order)
    assert order > 0.0, "only p-norms with p > 0 are implemented"
    # TODO(synk): ord in {inf, -inf, 0} (max/min/count norms) not implemented.

    lead = pred.shape[:-1]
    W = pred.shape[-1]
    rows = int(np.prod(lead)) if lead else 1
    out_dtype = pred.dtype
    itemsize = jnp.dtype(pred.dtype).itemsize

    p2 = pred.reshape(rows, W)
    g2 = gt.reshape(rows, W)
    w_flat = None
    if weights is not None:
        # weights broadcast against dist (shape lead + (1,)) -- broadcast in glue.
        w_flat = jnp.broadcast_to(
            jnp.asarray(weights, dtype=out_dtype), lead + (1,)).reshape(rows)

    use_fold = False
    if W < _FOLD_LANE:
        k = _FOLD_LANE // math.gcd(W, _FOLD_LANE)
        if k * W <= _MAX_FOLDED_WIDTH:
            use_fold = True

    if use_fold:
        # ---------------- small-W path: fold rows into lanes ----------------
        kW = k * W
        rows_f = _cdiv(rows, k)
        tr, rows_f_p = _plan_row_tiling(rows_f, kW, itemsize)
        rows_p = rows_f_p * k
        row_pad = rows_p - rows
        if row_pad:
            p2 = jnp.pad(p2, ((0, row_pad), (0, 0)))
            g2 = jnp.pad(g2, ((0, row_pad), (0, 0)))
        p2 = p2.reshape(rows_f_p, kW)
        g2 = g2.reshape(rows_f_p, kW)
        # static segment-sum matrix: rows j*W..(j+1)*W-1 -> column j
        seg = jnp.asarray(np.kron(np.eye(k), np.ones((W, 1))), dtype=jnp.float32)

        grid = (rows_f_p // tr,)
        in_spec = pl.BlockSpec((tr, kW), lambda i: (i, 0))
        seg_spec = pl.BlockSpec((kW, k), lambda i: (0, 0))
        out_spec = pl.BlockSpec((tr, k), lambda i: (i, 0))
        out_shape = jax.ShapeDtypeStruct((rows_f_p, k), out_dtype)
        cp = pltpu.CompilerParams(dimension_semantics=("parallel",),
                                  vmem_limit_bytes=_VMEM_LIMIT_BYTES)

        if weights is None:
            out2 = pl.pallas_call(
                functools.partial(_fold_kernel, order=order),
                out_shape=out_shape, grid=grid,
                in_specs=[in_spec, in_spec, seg_spec],
                out_specs=out_spec,
                compiler_params=cp,
            )(p2, g2, seg)
        else:
            if row_pad:
                w_flat = jnp.pad(w_flat, (0, row_pad))
            w2 = w_flat.reshape(rows_f_p, k)
            w_spec = pl.BlockSpec((tr, k), lambda i: (i, 0))
            out2 = pl.pallas_call(
                functools.partial(_fold_weighted_kernel, order=order),
                out_shape=out_shape, grid=grid,
                in_specs=[in_spec, in_spec, seg_spec, w_spec],
                out_specs=out_spec,
                compiler_params=cp,
            )(p2, g2, seg, w2)

        out_flat = out2.reshape(rows_p)[:rows]
        return out_flat.reshape(lead + (1,))

    elif W <= _K_TILE_THRESHOLD:
        # ---------------- medium-W path: full-width blocks -------------------
        tr, rows_p = _plan_row_tiling(rows, max(W, _FOLD_LANE), itemsize)
        row_pad = rows_p - rows
        if row_pad:
            p2 = jnp.pad(p2, ((0, row_pad), (0, 0)))
            g2 = jnp.pad(g2, ((0, row_pad), (0, 0)))
        grid = (rows_p // tr,)
        in_spec = pl.BlockSpec((tr, W), lambda i: (i, 0))
        out_spec = pl.BlockSpec((tr, 1), lambda i: (i, 0))
        out_shape = jax.ShapeDtypeStruct((rows_p, 1), out_dtype)
        cp = pltpu.CompilerParams(dimension_semantics=("parallel",),
                                  vmem_limit_bytes=_VMEM_LIMIT_BYTES)

        if weights is None:
            out2 = pl.pallas_call(
                functools.partial(_wide_kernel, order=order),
                out_shape=out_shape, grid=grid,
                in_specs=[in_spec, in_spec], out_specs=out_spec,
                compiler_params=cp,
            )(p2, g2)
        else:
            if row_pad:
                w_flat = jnp.pad(w_flat, (0, row_pad))
            w2 = w_flat.reshape(rows_p, 1)
            w_spec = pl.BlockSpec((tr, 1), lambda i: (i, 0))
            out2 = pl.pallas_call(
                functools.partial(_wide_weighted_kernel, order=order),
                out_shape=out_shape, grid=grid,
                in_specs=[in_spec, in_spec, w_spec], out_specs=out_spec,
                compiler_params=cp,
            )(p2, g2, w2)

        return out2.reshape(rows_p)[:rows].reshape(lead + (1,))

    else:
        # ---------------- large-W path: K-tiled reduction ---------------------
        tk = _K_TILE
        W_p = _round_up(W, tk)
        tr, rows_p = _plan_row_tiling(rows, tk, itemsize)
        row_pad = rows_p - rows
        if row_pad or W_p > W:
            p2 = jnp.pad(p2, ((0, row_pad), (0, W_p - W)))
            g2 = jnp.pad(g2, ((0, row_pad), (0, W_p - W)))
        grid = (rows_p // tr, W_p // tk)
        in_spec = pl.BlockSpec((tr, tk), lambda i, kk: (i, kk))
        out_spec = pl.BlockSpec((tr, 1), lambda i, kk: (i, 0))
        out_shape = jax.ShapeDtypeStruct((rows_p, 1), out_dtype)
        cp = pltpu.CompilerParams(dimension_semantics=("parallel", "arbitrary"),
                                  vmem_limit_bytes=_VMEM_LIMIT_BYTES)
        scratch = [pltpu.VMEM((tr, 1), jnp.float32)]

        if weights is None:
            out2 = pl.pallas_call(
                functools.partial(_ktiled_kernel, order=order),
                out_shape=out_shape, grid=grid,
                in_specs=[in_spec, in_spec], out_specs=out_spec,
                scratch_shapes=scratch, compiler_params=cp,
            )(p2, g2)
        else:
            if row_pad:
                w_flat = jnp.pad(w_flat, (0, row_pad))
            w2 = w_flat.reshape(rows_p, 1)
            w_spec = pl.BlockSpec((tr, 1), lambda i, kk: (i, 0))
            out2 = pl.pallas_call(
                functools.partial(_ktiled_weighted_kernel, order=order),
                out_shape=out_shape, grid=grid,
                in_specs=[in_spec, in_spec, w_spec], out_specs=out_spec,
                scratch_shapes=scratch, compiler_params=cp,
            )(p2, g2, w2)

        return out2.reshape(rows_p)[:rows].reshape(lead + (1,))

    # TODO(synk): the `dist[mask]` path produces a data-dependent (dynamic)
    # output shape and has no clean Pallas/jit equivalent; it is omitted.


if __name__ == "__main__":
    key = jax.random.PRNGKey(0)
    ks = jax.random.split(key, 8)

    # ---- Path 1: small W (W=16 < 128) -> folded-lane kernel ----------------
    shape = (2, 4, 16, 16)
    pred = jax.random.normal(ks[0], shape, dtype=jnp.float32)
    gt = jax.random.normal(ks[1], shape, dtype=jnp.float32)
    weights = jax.random.uniform(ks[2], (2, 4, 16, 1), dtype=jnp.float32)

    ref = jnp.linalg.norm(gt - pred, ord=2, axis=-1, keepdims=True)
    out = jax.block_until_ready(distance(pred, gt, order=2.0))
    assert out.shape == (2, 4, 16, 1)
    np.testing.assert_allclose(np.asarray(out), np.asarray(ref),
                               rtol=1e-4, atol=1e-5)

    out_w = jax.block_until_ready(distance(pred, gt, weights=weights, order=2.0))
    np.testing.assert_allclose(np.asarray(out_w), np.asarray(weights * ref),
                               rtol=1e-4, atol=1e-5)

    for o in (1.0, 3.0):
        out_o = jax.block_until_ready(distance(pred, gt, order=o))
        ref_o = jnp.linalg.norm(gt - pred, ord=o, axis=-1, keepdims=True)
        np.testing.assert_allclose(np.asarray(out_o), np.asarray(ref_o),
                                   rtol=1e-4, atol=1e-5)

    # ---- Path 2: W >= 128 -> full-width blocks -----------------------------
    shape2 = (2, 4, 8, 256)
    pred2 = jax.random.normal(ks[3], shape2, dtype=jnp.float32)
    gt2 = jax.random.normal(ks[4], shape2, dtype=jnp.float32)
    w2 = jax.random.uniform(ks[5], (2, 4, 8, 1), dtype=jnp.float32)
    ref2 = jnp.linalg.norm(gt2 - pred2, ord=2, axis=-1, keepdims=True)
    out2 = jax.block_until_ready(distance(pred2, gt2, order=2.0))
    np.testing.assert_allclose(np.asarray(out2), np.asarray(ref2),
                               rtol=1e-4, atol=1e-5)
    out2w = jax.block_until_ready(distance(pred2, gt2, weights=w2, order=2.0))
    np.testing.assert_allclose(np.asarray(out2w), np.asarray(w2 * ref2),
                               rtol=1e-4, atol=1e-5)

    # ---- Path 3: very large W -> K-tiled accumulator kernel ----------------
    shape3 = (2, 8, 6144)
    pred3 = jax.random.normal(ks[6], shape3, dtype=jnp.float32)
    gt3 = jax.random.normal(ks[7], shape3, dtype=jnp.float32)
    ref3 = jnp.linalg.norm(gt3 - pred3, ord=2, axis=-1, keepdims=True)
    out3 = jax.block_until_ready(distance(pred3, gt3, order=2.0))
    np.testing.assert_allclose(np.asarray(out3), np.asarray(ref3),
                               rtol=1e-4, atol=1e-5)
    w3 = jax.random.uniform(jax.random.PRNGKey(1), (2, 8, 1), dtype=jnp.float32)
    out3w = jax.block_until_ready(distance(pred3, gt3, weights=w3, order=2.0))
    np.testing.assert_allclose(np.asarray(out3w), np.asarray(w3 * ref3),
                               rtol=1e-4, atol=1e-5)

    print("KERNEL_OK")
</pallas_src>

<mosaic_0001>
module attributes {stable_mosaic.version = 11 : i64} {
  func.func @_fold_kernel(%arg0: i32, %arg1: memref<16x128xf32, #tpu.memory_space<vmem>>, %arg2: memref<16x128xf32, #tpu.memory_space<vmem>>, %arg3: memref<128x8xf32, #tpu.memory_space<vmem>>, %arg4: memref<16x8xf32, #tpu.memory_space<vmem>>) attributes {dimension_semantics = [#tpu.dimension_semantics<parallel>], iteration_bounds = array<i64: 1>, scalar_prefetch = 0 : i64, scratch_operands = 0 : i64, tpu.core_type = #tpu.core_type<tc>, window_params = [{transform_indices = @transform_0, window_bounds = array<i64: 16, 128>}, {transform_indices = @transform_1, window_bounds = array<i64: 16, 128>}, {pipeline_mode = #tpu.pipeline_mode<synchronous>, transform_indices = @transform_2, window_bounds = array<i64: 128, 8>}, {transform_indices = @transform_3, window_bounds = array<i64: 16, 8>}]} {
    %c0 = arith.constant 0 : index
    %c0_0 = arith.constant 0 : index
    %0 = vector.load %arg2[%c0, %c0_0] : memref<16x128xf32, #tpu.memory_space<vmem>>, vector<16x128xf32>
    %c0_1 = arith.constant 0 : index
    %c0_2 = arith.constant 0 : index
    %1 = vector.load %arg1[%c0_1, %c0_2] : memref<16x128xf32, #tpu.memory_space<vmem>>, vector<16x128xf32>
    %2 = arith.subf %0, %1 : vector<16x128xf32>
    %3 = arith.mulf %2, %2 : vector<16x128xf32>
    %c0_3 = arith.constant 0 : index
    %c0_4 = arith.constant 0 : index
    %4 = vector.load %arg3[%c0_3, %c0_4] : memref<128x8xf32, #tpu.memory_space<vmem>>, vector<128x8xf32>
    %cst = arith.constant dense<0.000000e+00> : vector<16x8xf32>
    %5 = tpu.matmul %3, %4, %cst {dimension_numbers = #tpu.dot_dimension_numbers<[1], [0], [0], [1], [0, 0, 1, 1], [], []>, precision = #tpu.contract_precision<fp32>} : vector<16x128xf32>, vector<128x8xf32>, vector<16x8xf32> -> vector<16x8xf32>
    %6 = math.sqrt %5 : vector<16x8xf32>
    %c0_5 = arith.constant 0 : index
    %c0_6 = arith.constant 0 : index
    %7 = vector.load %arg4[%c0_5, %c0_6] : memref<16x8xf32, #tpu.memory_space<vmem>>, vector<16x8xf32>
    tpu.vector_store %arg4[%c0_5, %c0_6], %6 {strides = array<i32>} : memref<16x8xf32, #tpu.memory_space<vmem>>, vector<16x8xf32>,
    return
  }
  func.func @transform_0(%arg0: i32) -> (i32, i32) {
    %c0_i32 = arith.constant 0 : i32
    %c0_i32_0 = arith.constant 0 : i32
    return %arg0, %c0_i32 : i32, i32
  }
  func.func @transform_1(%arg0: i32) -> (i32, i32) {
    %c0_i32 = arith.constant 0 : i32
    %c0_i32_0 = arith.constant 0 : i32
    return %arg0, %c0_i32 : i32, i32
  }
  func.func @transform_2(%arg0: i32) -> (i32, i32) {
    %c0_i32 = arith.constant 0 : i32
    %c0_i32_0 = arith.constant 0 : i32
    %c0_i32_1 = arith.constant 0 : i32
    return %c0_i32, %c0_i32_0 : i32, i32
  }
  func.func @transform_3(%arg0: i32) -> (i32, i32) {
    %c0_i32 = arith.constant 0 : i32
    %c0_i32_0 = arith.constant 0 : i32
    return %arg0, %c0_i32 : i32, i32
  }
}

</mosaic_0001>

<llo_original>
// kernel: tpu_custom_call.1
$region0: #{tpu_custom_call.1}
  #allocation0 [shape = 'u32[]', space=smem, size = 0x4, offset = 0x4, fixed_abs, tag = 'smem constant byte address 0x4 - core index']
  #allocation1 [shape = 'u32[72,128]{1,0:T(1,128)}', space=vmem, size = 0x9000, scoped, tag = 'internal scratch']
  %s0 = inlined_call_operand.vmem [shape: f32[16,128], index: 0, kind: input, shape index: {}]
  %s1 = inlined_call_operand.vmem [shape: f32[16,128], index: 1, kind: input, shape index: {}]
  %s2 = inlined_call_operand.vmem [shape: f32[128,8], index: 2, kind: input, shape index: {}]
  %s3 = inlined_call_operand.vmem [shape: f32[16,8], index: 3, kind: output, shape index: {}]
  %s4 = sld [smem:[#allocation0]]
  $region22: #{tpu_custom_call.1} parent=0
    _
  %s6 = ssub.s32 1, %s4
  %s7 = scalar_select 0, %s6, %s4
  // Predicated region
  $region2: #{tpu_custom_call.1} parent=0 // pred_check
    _
  $region3: #{tpu_custom_call.1} parent=0 // pred_check_branch
    %9 = sbr.rel (0) target = $region5
  $region4: #{tpu_custom_call.1} parent=0 // pred_region
    _
  $region5: #{tpu_custom_call.1} parent=0 // pred_fallthru
    _
  // Predicated region
  $region6: #{tpu_custom_call.1} parent=0 // pred_check
    _
  $region7: #{tpu_custom_call.1} parent=0 // pred_check_branch
    %11 = sbr.rel (0) target = $region9
  $region8: #{tpu_custom_call.1} parent=0 // pred_region
    _
  $region9: #{tpu_custom_call.1} parent=0 // pred_fallthru
    _
  // Predicated region
  $region10: #{tpu_custom_call.1} parent=0 // pred_check
    _
  $region11: #{tpu_custom_call.1} parent=0 // pred_check_branch
    %13 = sbr.rel (0) target = $region13
  $region12: #{tpu_custom_call.1} parent=0 // pred_region
    _
  $region13: #{tpu_custom_call.1} parent=0 // pred_fallthru
    _
  %v14 = vld [vmem:[%s1] sm:$0xff]
  %v15 = vld [vmem:[%s1 + $0x8] sm:$0xff]
  %v16 = vld [vmem:[%s0] sm:$0xff]
  %v17 = vld [vmem:[%s0 + $0x8] sm:$0xff]
  %v18 = vsub.f32 %v14, %v16
  %v19 = vsub.f32 %v15, %v17
  %v20 = vmul.f32 %v18, %v18
  %v21 = vmul.f32 %v19, %v19
  %v22 = vld [vmem:[%s2] sm:$0xff]
  %v23 = vld [vmem:[%s2 + $0x8] sm:$0xff]
  %v24 = vld [vmem:[%s2 + $0x10] sm:$0xff]
  %v25 = vld [vmem:[%s2 + $0x18] sm:$0xff]
  %v26 = vld [vmem:[%s2 + $0x20] sm:$0xff]
  %v27 = vld [vmem:[%s2 + $0x28] sm:$0xff]
  %v28 = vld [vmem:[%s2 + $0x30] sm:$0xff]
  %v29 = vld [vmem:[%s2 + $0x38] sm:$0xff]
  %v30 = vld [vmem:[%s2 + $0x40] sm:$0xff]
  %v31 = vld [vmem:[%s2 + $0x48] sm:$0xff]
  %v32 = vld [vmem:[%s2 + $0x50] sm:$0xff]
  %v33 = vld [vmem:[%s2 + $0x58] sm:$0xff]
  %v34 = vld [vmem:[%s2 + $0x60] sm:$0xff]
  %v35 = vld [vmem:[%s2 + $0x68] sm:$0xff]
  %v36 = vld [vmem:[%s2 + $0x70] sm:$0xff]
  %v37 = vld [vmem:[%s2 + $0x78] sm:$0xff]
  %v38 = vand.u32 %v37, 4294901760
  %39 = vmatpush.msra.mxu0 %v38
  %v40 = vand.u32 %v36, 4294901760
  %41 = vmatpush.msra.mxu0 %v40
  %v42 = vand.u32 %v35, 4294901760
  %43 = vmatpush.msra.mxu0 %v42
  %v44 = vand.u32 %v34, 4294901760
  %45 = vmatpush.msra.mxu0 %v44
  %v46 = vand.u32 %v33, 4294901760
  %47 = vmatpush.msra.mxu0 %v46
  %v48 = vand.u32 %v32, 4294901760
  %49 = vmatpush.msra.mxu0 %v48
  %v50 = vand.u32 %v31, 4294901760
  %51 = vmatpush.msra.mxu0 %v50
  %v52 = vand.u32 %v30, 4294901760
  %53 = vmatpush.msra.mxu0 %v52
  %v54 = vand.u32 %v29, 4294901760
  %55 = vmatpush.msra.mxu0 %v54
  %v56 = vand.u32 %v28, 4294901760
  %57 = vmatpush.msra.mxu0 %v56
  %v58 = vand.u32 %v27, 4294901760
  %59 = vmatpush.msra.mxu0 %v58
  %v60 = vand.u32 %v26, 4294901760
  %61 = vmatpush.msra.mxu0 %v60
  %v62 = vand.u32 %v25, 4294901760
  %63 = vmatpush.msra.mxu0 %v62
  %v64 = vand.u32 %v24, 4294901760
  %65 = vmatpush.msra.mxu0 %v64
  %v66 = vand.u32 %v23, 4294901760
  %67 = vmatpush.msra.mxu0 %v66
  %v68 = vand.u32 %v22, 4294901760
  %69 = vmatpush.msra.mxu0 %v68
  %v70 = vand.u32 %v20, 4294901760
  %v71 = vsub.f32 %v20, %v70
  %v72 = vand.u32 %v71, 4294901760
  %v73 = vsub.f32 %v71, %v72
  %v74 = vand.u32 %v73, 4294901760
  %75 = vmatmul.f32.gmra.mxu0 %v74
  %v76 = vpop.f32.mrf.mxu0
  %v77 = vadd.f32 0.0, %v76
  %v78 = vand.u32 %v21, 4294901760
  %v79 = vsub.f32 %v21, %v78
  %v80 = vand.u32 %v79, 4294901760
  %v81 = vsub.f32 %v79, %v80
  %v82 = vand.u32 %v81, 4294901760
  %83 = vmatmul.f32.gmra.mxu0 %v82
  %v84 = vpop.f32.mrf.mxu0
  %v85 = vadd.f32 0.0, %v84
  %86 = vdwg.mxu0
  %v87 = vand.u32 %v37, 4294901760
  %v88 = vsub.f32 %v37, %v87
  %v89 = vand.u32 %v88, 4294901760
  %v90 = vsub.f32 %v88, %v89
  %v91 = vand.u32 %v90, 4294901760
  %92 = vmatpush.msra.mxu0 %v91
  %v93 = vand.u32 %v36, 4294901760
  %v94 = vsub.f32 %v36, %v93
  %v95 = vand.u32 %v94, 4294901760
  %v96 = vsub.f32 %v94, %v95
  %v97 = vand.u32 %v96, 4294901760
  %98 = vmatpush.msra.mxu0 %v97
  %v99 = vand.u32 %v35, 4294901760
  %v100 = vsub.f32 %v35, %v99
  %v101 = vand.u32 %v100, 4294901760
  %v102 = vsub.f32 %v100, %v101
  %v103 = vand.u32 %v102, 4294901760
  %104 = vmatpush.msra.mxu0 %v103
  %v105 = vand.u32 %v34, 4294901760
  %v106 = vsub.f32 %v34, %v105
  %v107 = vand.u32 %v106, 4294901760
  %v108 = vsub.f32 %v106, %v107
  %v109 = vand.u32 %v108, 4294901760
  %110 = vmatpush.msra.mxu0 %v109
  %v111 = vand.u32 %v33, 4294901760
  %v112 = vsub.f32 %v33, %v111
  %v113 = vand.u32 %v112, 4294901760
  %v114 = vsub.f32 %v112, %v113
  %v115 = vand.u32 %v114, 4294901760
  %116 = vmatpush.msra.mxu0 %v115
  %v117 = vand.u32 %v32, 4294901760
  %v118 = vsub.f32 %v32, %v117
  %v119 = vand.u32 %v118, 4294901760
  %v120 = vsub.f32 %v118, %v119
  %v121 = vand.u32 %v120, 4294901760
  %122 = vmatpush.msra.mxu0 %v121
  %v123 = vand.u32 %v31, 4294901760
  %v124 = vsub.f32 %v31, %v123
  %v125 = vand.u32 %v124, 4294901760
  %v126 = vsub.f32 %v124, %v125
  %v127 = vand.u32 %v126, 4294901760
  %128 = vmatpush.msra.mxu0 %v127
  %v129 = vand.u32 %v30, 4294901760
  %v130 = vsub.f32 %v30, %v129
  %v131 = vand.u32 %v130, 4294901760
  %v132 = vsub.f32 %v130, %v131
  %v133 = vand.u32 %v132, 4294901760
  %134 = vmatpush.msra.mxu0 %v133
  %v135 = vand.u32 %v29, 4294901760
  %v136 = vsub.f32 %v29, %v135
  %v137 = vand.u32 %v136, 4294901760
  %v138 = vsub.f32 %v136, %v137
  %v139 = vand.u32 %v138, 4294901760
  %140 = vmatpush.msra.mxu0 %v139
  %v141 = vand.u32 %v28, 4294901760
  %v142 = vsub.f32 %v28, %v141
  %v143 = vand.u32 %v142, 4294901760
  %v144 = vsub.f32 %v142, %v143
  %v145 = vand.u32 %v144, 4294901760
  %146 = vmatpush.msra.mxu0 %v145
  %v147 = vand.u32 %v27, 4294901760
  %v148 = vsub.f32 %v27, %v147
  %v149 = vand.u32 %v148, 4294901760
  %v150 = vsub.f32 %v148, %v149
  %v151 = vand.u32 %v150, 4294901760
  %152 = vmatpush.msra.mxu0 %v151
  %v153 = vand.u32 %v26, 4294901760
  %v154 = vsub.f32 %v26, %v153
  %v155 = vand.u32 %v154, 4294901760
  %v156 = vsub.f32 %v154, %v155
  %v157 = vand.u32 %v156, 4294901760
  %158 = vmatpush.msra.mxu0 %v157
  %v159 = vand.u32 %v25, 4294901760
  %v160 = vsub.f32 %v25, %v159
  %v161 = vand.u32 %v160, 4294901760
  %v162 = vsub.f32 %v160, %v161
  %v163 = vand.u32 %v162, 4294901760
  %164 = vmatpush.msra.mxu0 %v163
  %v165 = vand.u32 %v24, 4294901760
  %v166 = vsub.f32 %v24, %v165
  %v167 = vand.u32 %v166, 4294901760
  %v168 = vsub.f32 %v166, %v167
  %v169 = vand.u32 %v168, 4294901760
  %170 = vmatpush.msra.mxu0 %v169
  %v171 = vand.u32 %v23, 4294901760
  %v172 = vsub.f32 %v23, %v171
  %v173 = vand.u32 %v172, 4294901760
  %v174 = vsub.f32 %v172, %v173
  %v175 = vand.u32 %v174, 4294901760
  %176 = vmatpush.msra.mxu0 %v175
  %v177 = vand.u32 %v22, 4294901760
  %v178 = vsub.f32 %v22, %v177
  %v179 = vand.u32 %v178, 4294901760
  %v180 = vsub.f32 %v178, %v179
  %v181 = vand.u32 %v180, 4294901760
  %182 = vmatpush.msra.mxu0 %v181
  %v183 = vand.u32 %v20, 4294901760
  %184 = vmatmul.f32.gmra.mxu0 %v183
  %v185 = vpop.f32.mrf.mxu0
  %v186 = vadd.f32 %v77, %v185
  %v187 = vand.u32 %v21, 4294901760
  %188 = vmatmul.f32.gmra.mxu0 %v187
  %v189 = vpop.f32.mrf.mxu0
  %v190 = vadd.f32 %v85, %v189
  %191 = vdwg.mxu0
  %v192 = vand.u32 %v37, 4294901760
  %v193 = vsub.f32 %v37, %v192
  %194 = vmatpush.msra.mxu0 %v193
  %v195 = vand.u32 %v36, 4294901760
  %v196 = vsub.f32 %v36, %v195
  %197 = vmatpush.msra.mxu0 %v196
  %v198 = vand.u32 %v35, 4294901760
  %v199 = vsub.f32 %v35, %v198
  %200 = vmatpush.msra.mxu0 %v199
  %v201 = vand.u32 %v34, 4294901760
  %v202 = vsub.f32 %v34, %v201
  %203 = vmatpush.msra.mxu0 %v202
  %v204 = vand.u32 %v33, 4294901760
  %v205 = vsub.f32 %v33, %v204
  %206 = vmatpush.msra.mxu0 %v205
  %v207 = vand.u32 %v32, 4294901760
  %v208 = vsub.f32 %v32, %v207
  %209 = vmatpush.msra.mxu0 %v208
  %v210 = vand.u32 %v31, 4294901760
  %v211 = vsub.f32 %v31, %v210
  %212 = vmatpush.msra.mxu0 %v211
  %v213 = vand.u32 %v30, 4294901760
  %v214 = vsub.f32 %v30, %v213
  %215 = vmatpush.msra.mxu0 %v214
  %v216 = vand.u32 %v29, 4294901760
  %v217 = vsub.f32 %v29, %v216
  %218 = vmatpush.msra.mxu0 %v217
  %v219 = vand.u32 %v28, 4294901760
  %v220 = vsub.f32 %v28, %v219
  %221 = vmatpush.msra.mxu0 %v220
  %v222 = vand.u32 %v27, 4294901760
  %v223 = vsub.f32 %v27, %v222
  %224 = vmatpush.msra.mxu0 %v223
  %v225 = vand.u32 %v26, 4294901760
  %v226 = vsub.f32 %v26, %v225
  %227 = vmatpush.msra.mxu0 %v226
  %v228 = vand.u32 %v25, 4294901760
  %v229 = vsub.f32 %v25, %v228
  %230 = vmatpush.msra.mxu0 %v229
  %v231 = vand.u32 %v24, 4294901760
  %v232 = vsub.f32 %v24, %v231
  %233 = vmatpush.msra.mxu0 %v232
  %v234 = vand.u32 %v23, 4294901760
  %v235 = vsub.f32 %v23, %v234
  %236 = vmatpush.msra.mxu0 %v235
  %v237 = vand.u32 %v22, 4294901760
  %v238 = vsub.f32 %v22, %v237
  %239 = vmatpush.msra.mxu0 %v238
  %v240 = vand.u32 %v20, 4294901760
  %v241 = vsub.f32 %v20, %v240
  %242 = vmatmul.f32.gmra.mxu0 %v241
  %v243 = vpop.f32.mrf.mxu0
  %v244 = vadd.f32 %v186, %v243
  %v245 = vand.u32 %v21, 4294901760
  %v246 = vsub.f32 %v21, %v245
  %247 = vmatmul.f32.gmra.mxu0 %v246
  %v248 = vpop.f32.mrf.mxu0
  %v249 = vadd.f32 %v190, %v248
  %250 = vdwg.mxu0
  %v251 = vand.u32 %v37, 4294901760
  %252 = vmatpush.msra.mxu0 %v251
  %v253 = vand.u32 %v36, 4294901760
  %254 = vmatpush.msra.mxu0 %v253
  %v255 = vand.u32 %v35, 4294901760
  %256 = vmatpush.msra.mxu0 %v255
  %v257 = vand.u32 %v34, 4294901760
  %258 = vmatpush.msra.mxu0 %v257
  %v259 = vand.u32 %v33, 4294901760
  %260 = vmatpush.msra.mxu0 %v259
  %v261 = vand.u32 %v32, 4294901760
  %262 = vmatpush.msra.mxu0 %v261
  %v263 = vand.u32 %v31, 4294901760
  %264 = vmatpush.msra.mxu0 %v263
  %v265 = vand.u32 %v30, 4294901760
  %266 = vmatpush.msra.mxu0 %v265
  %v267 = vand.u32 %v29, 4294901760
  %268 = vmatpush.msra.mxu0 %v267
  %v269 = vand.u32 %v28, 4294901760
  %270 = vmatpush.msra.mxu0 %v269
  %v271 = vand.u32 %v27, 4294901760
  %272 = vmatpush.msra.mxu0 %v271
  %v273 = vand.u32 %v26, 4294901760
  %274 = vmatpush.msra.mxu0 %v273
  %v275 = vand.u32 %v25, 4294901760
  %276 = vmatpush.msra.mxu0 %v275
  %v277 = vand.u32 %v24, 4294901760
  %278 = vmatpush.msra.mxu0 %v277
  %v279 = vand.u32 %v23, 4294901760
  %280 = vmatpush.msra.mxu0 %v279
  %v281 = vand.u32 %v22, 4294901760
  %282 = vmatpush.msra.mxu0 %v281
  %v283 = vand.u32 %v20, 4294901760
  %v284 = vsub.f32 %v20, %v283
  %v285 = vand.u32 %v284, 4294901760
  %286 = vmatmul.f32.gmra.mxu0 %v285
  %v287 = vpop.f32.mrf.mxu0
  %v288 = vadd.f32 %v244, %v287
  %v289 = vand.u32 %v21, 4294901760
  %v290 = vsub.f32 %v21, %v289
  %v291 = vand.u32 %v290, 4294901760
  %292 = vmatmul.f32.gmra.mxu0 %v291
  %v293 = vpop.f32.mrf.mxu0
  %v294 = vadd.f32 %v249, %v293
  %295 = vdwg.mxu0
  %v296 = vand.u32 %v37, 4294901760
  %v297 = vsub.f32 %v37, %v296
  %v298 = vand.u32 %v297, 4294901760
  %299 = vmatpush.msra.mxu0 %v298
  %v300 = vand.u32 %v36, 4294901760
  %v301 = vsub.f32 %v36, %v300
  %v302 = vand.u32 %v301, 4294901760
  %303 = vmatpush.msra.mxu0 %v302
  %v304 = vand.u32 %v35, 4294901760
  %v305 = vsub.f32 %v35, %v304
  %v306 = vand.u32 %v305, 4294901760
  %307 = vmatpush.msra.mxu0 %v306
  %v308 = vand.u32 %v34, 4294901760
  %v309 = vsub.f32 %v34, %v308
  %v310 = vand.u32 %v309, 4294901760
  %311 = vmatpush.msra.mxu0 %v310
  %v312 = vand.u32 %v33, 4294901760
  %v313 = vsub.f32 %v33, %v312
  %v314 = vand.u32 %v313, 4294901760
  %315 = vmatpush.msra.mxu0 %v314
  %v316 = vand.u32 %v32, 4294901760
  %v317 = vsub.f32 %v32, %v316
  %v318 = vand.u32 %v317, 4294901760
  %319 = vmatpush.msra.mxu0 %v318
  %v320 = vand.u32 %v31, 4294901760
  %v321 = vsub.f32 %v31, %v320
  %v322 = vand.u32 %v321, 4294901760
  %323 = vmatpush.msra.mxu0 %v322
  %v324 = vand.u32 %v30, 4294901760
  %v325 = vsub.f32 %v30, %v324
  %v326 = vand.u32 %v325, 4294901760
  %327 = vmatpush.msra.mxu0 %v326
  %v328 = vand.u32 %v29, 4294901760
  %v329 = vsub.f32 %v29, %v328
  %v330 = vand.u32 %v329, 4294901760
  %331 = vmatpush.msra.mxu0 %v330
  %v332 = vand.u32 %v28, 4294901760
  %v333 = vsub.f32 %v28, %v332
  %v334 = vand.u32 %v333, 4294901760
  %335 = vmatpush.msra.mxu0 %v334
  %v336 = vand.u32 %v27, 4294901760
  %v337 = vsub.f32 %v27, %v336
  %v338 = vand.u32 %v337, 4294901760
  %339 = vmatpush.msra.mxu0 %v338
  %v340 = vand.u32 %v26, 4294901760
  %v341 = vsub.f32 %v26, %v340
  %v342 = vand.u32 %v341, 4294901760
  %343 = vmatpush.msra.mxu0 %v342
  %v344 = vand.u32 %v25, 4294901760
  %v345 = vsub.f32 %v25, %v344
  %v346 = vand.u32 %v345, 4294901760
  %347 = vmatpush.msra.mxu0 %v346
  %v348 = vand.u32 %v24, 4294901760
  %v349 = vsub.f32 %v24, %v348
  %v350 = vand.u32 %v349, 4294901760
  %351 = vmatpush.msra.mxu0 %v350
  %v352 = vand.u32 %v23, 4294901760
  %v353 = vsub.f32 %v23, %v352
  %v354 = vand.u32 %v353, 4294901760
  %355 = vmatpush.msra.mxu0 %v354
  %v356 = vand.u32 %v22, 4294901760
  %v357 = vsub.f32 %v22, %v356
  %v358 = vand.u32 %v357, 4294901760
  %359 = vmatpush.msra.mxu0 %v358
  %v360 = vand.u32 %v20, 4294901760
  %361 = vmatmul.f32.gmra.mxu0 %v360
  %v362 = vpop.f32.mrf.mxu0
  %v363 = vadd.f32 %v288, %v362
  %v364 = vand.u32 %v21, 4294901760
  %365 = vmatmul.f32.gmra.mxu0 %v364
  %v366 = vpop.f32.mrf.mxu0
  %v367 = vadd.f32 %v294, %v366
  %368 = vdwg.mxu0
  %v369 = vand.u32 %v37, 4294901760
  %370 = vmatpush.msra.mxu0 %v369
  %v371 = vand.u32 %v36, 4294901760
  %372 = vmatpush.msra.mxu0 %v371
  %v373 = vand.u32 %v35, 4294901760
  %374 = vmatpush.msra.mxu0 %v373
  %v375 = vand.u32 %v34, 4294901760
  %376 = vmatpush.msra.mxu0 %v375
  %v377 = vand.u32 %v33, 4294901760
  %378 = vmatpush.msra.mxu0 %v377
  %v379 = vand.u32 %v32, 4294901760
  %380 = vmatpush.msra.mxu0 %v379
  %v381 = vand.u32 %v31, 4294901760
  %382 = vmatpush.msra.mxu0 %v381
  %v383 = vand.u32 %v30, 4294901760
  %384 = vmatpush.msra.mxu0 %v383
  %v385 = vand.u32 %v29, 4294901760
  %386 = vmatpush.msra.mxu0 %v385
  %v387 = vand.u32 %v28, 4294901760
  %388 = vmatpush.msra.mxu0 %v387
  %v389 = vand.u32 %v27, 4294901760
  %390 = vmatpush.msra.mxu0 %v389
  %v391 = vand.u32 %v26, 4294901760
  %392 = vmatpush.msra.mxu0 %v391
  %v393 = vand.u32 %v25, 4294901760
  %394 = vmatpush.msra.mxu0 %v393
  %v395 = vand.u32 %v24, 4294901760
  %396 = vmatpush.msra.mxu0 %v395
  %v397 = vand.u32 %v23, 4294901760
  %398 = vmatpush.msra.mxu0 %v397
  %v399 = vand.u32 %v22, 4294901760
  %400 = vmatpush.msra.mxu0 %v399
  %v401 = vand.u32 %v20, 4294901760
  %402 = vmatmul.f32.gmra.mxu0 %v401
  %v403 = vpop.f32.mrf.mxu0
  %v404 = vadd.f32 %v363, %v403
  %v405 = vand.u32 %v21, 4294901760
  %406 = vmatmul.f32.gmra.mxu0 %v405
  %v407 = vpop.f32.mrf.mxu0
  %v408 = vadd.f32 %v367, %v407
  %409 = vdwg.mxu0
  %v410 = vrsqrt.pop %v404
  %v411 = vmul.f32 %v410, %v404
  %v412 = vmul.f32 %v411, %v410
  %v413 = vmul.f32 0.5, %v412
  %v414 = vsub.f32 1.5, %v413
  %v415 = vmul.f32 %v410, %v414
  %v416 = vmul.f32 %v404, %v415
  %vm417 = vcmp.eq.f32.partialorder %v404, inf
  %v418 = vsel %vm417, %v404, %v416
  %vm419 = vcmp.eq.f32.partialorder %v404, 0.0
  %v420 = vand.u32 %v404, 2147483648
  %v421 = vsel %vm419, %v420, %v418
  %v422 = vrsqrt.pop %v408
  %v423 = vmul.f32 %v422, %v408
  %v424 = vmul.f32 %v423, %v422
  %v425 = vmul.f32 0.5, %v424
  %v426 = vsub.f32 1.5, %v425
  %v427 = vmul.f32 %v422, %v426
  %v428 = vmul.f32 %v408, %v427
  %vm429 = vcmp.eq.f32.partialorder %v408, inf
  %v430 = vsel %vm429, %v408, %v428
  %vm431 = vcmp.eq.f32.partialorder %v408, 0.0
  %v432 = vand.u32 %v408, 2147483648
  %v433 = vsel %vm431, %v432, %v430
  %vm434 = vcmask 64512
  %435 = vst.msk [vmem:[%s3] sm:$0xff] %vm434, %v421
  %436 = vst.msk [vmem:[%s3 + $0x8] sm:$0xff] %vm434, %v433
  // Predicated region
  $region14: #{tpu_custom_call.1} parent=0 // pred_check
    _
  $region15: #{tpu_custom_call.1} parent=0 // pred_check_branch
    %438 = sbr.rel (0) target = $region17
  $region16: #{tpu_custom_call.1} parent=0 // pred_region
    _
  $region17: #{tpu_custom_call.1} parent=0 // pred_fallthru
    _
  // Predicated region
  $region18: #{tpu_custom_call.1} parent=0 // pred_check
    _
  $region19: #{tpu_custom_call.1} parent=0 // pred_check_branch
    %440 = sbr.rel (0) target = $region21
  $region20: #{tpu_custom_call.1} parent=0 // pred_region
    _
  $region21: #{tpu_custom_call.1} parent=0 // pred_fallthru
    _

</llo_original>
